<compile_context>
chip_gen: v6e
topology: v6e:2x2x1
jax: 0.10.0
libtpu: 0.0.40
codegen_flags: <defaults>
</compile_context>

<pallas_src>
import functools
import math

import jax
import jax.numpy as jnp
from jax import lax
from jax.experimental import pallas as pl
from jax.experimental.pallas import tpu as pltpu


def _round_up(x, m):
    return ((x + m - 1) // m) * m


def _conv1d_sub_kernel(x_ref, xh_ref, w_ref, b_ref, o_ref, *,
                       kernel_size, stride, halo, f_in):
    """One (batch, time-tile) grid step.

    x_ref : (1, t_tile, stride*F_in)    de-interleaved input rows (bf16)
    xh_ref: (1, halo_rows, stride*F_in) first rows of the *next* tile (halo)
    w_ref : (K*F_in, F_out)             im2col weight matrix (bf16)
    b_ref : (1, F_out)                  bias (f32)
    o_ref : (1, t_tile, F_out)          output tile
    """
    K, s, H, F = kernel_size, stride, halo, f_in
    xm = x_ref[0]                                   # (t_tile, s*F)
    sF = s * F
    pieces = []
    for h in range(H + 1):
        lanes = min(s, K - h * s) * F               # taps covered by this piece
        if h == 0:
            blk = xm
        else:
            # window shifted down by h rows; the last h rows come from the halo.
            blk = jnp.concatenate([xm[h:, :], xh_ref[0][:h, :]], axis=0)
        pieces.append(blk if lanes == sF else blk[:, :lanes])
    xcat = pieces[0] if len(pieces) == 1 else jnp.concatenate(pieces, axis=-1)
    # single MXU matmul: (t_tile, K*F) @ (K*F, F_out) with f32 accumulation.
    acc = jnp.dot(xcat, w_ref[...], preferred_element_type=jnp.float32)
    acc = acc + b_ref[...]
    o_ref[0] = jnp.maximum(acc, 0.0).astype(o_ref.dtype)


def conv1d_subsampler_forward(xs, xlens, weight, bias, *, factor, kernel_size,
                              t_tile=256, compute_dtype=jnp.bfloat16):
    """Pallas implementation of Conv1dSubsampler.forward (batch_first=True).

    xs:     [B, T, F] float32
    xlens:  [B]       int32
    weight: [F_out, F_in, K]  (PyTorch conv1d layout)
    bias:   [F_out]
    """
    if factor == 1:
        # Matches the PyTorch module: factor == 1 bypasses the conv entirely.
        return xs, xlens
    assert kernel_size % 2 == 1, "Kernel size should be odd for 'same' conv."

    B, T, F = xs.shape
    F_out, F_in, K = weight.shape
    assert K == kernel_size and F_in == F
    s = factor
    pad = (K - 1) // 2
    t_out = (T + 2 * pad - K) // s + 1
    halo = (K - 1) // s          # extra de-interleaved rows needed per output row

    halo_rows = max(8, _round_up(max(halo, 1), 8))
    tt = _round_up(min(t_tile, _round_up(t_out, 8)), halo_rows)
    n_tiles = pl.cdiv(t_out, tt)
    blocks_per_tile = tt // halo_rows
    n_groups = n_tiles * tt + halo_rows    # sized so every block is fully in bounds
    t_total = n_groups * s

    # glue (plain XLA): cast to bf16, zero-pad time ('same' conv left pad +
    # enough zeros on the right), de-interleave the stride into the lane axis:
    # [B, t_total, F] -> [B, n_groups, s*F].
    # TODO(synk): fuse the pad+cast into the kernel (manual DMA / Element
    # indexing) to drop this one extra HBM pass over the activations.
    x_c = xs.astype(compute_dtype)
    right = max(0, t_total - pad - T)
    x_p = jnp.pad(x_c, ((0, 0), (pad, right), (0, 0)))[:, :t_total]
    x_r = x_p.reshape(B, n_groups, s * F)

    # im2col weights: (F_out, F_in, K) -> (K*F_in, F_out), tap-major rows.
    w_cat = jnp.transpose(weight, (2, 1, 0)).reshape(K * F, F_out).astype(compute_dtype)
    b_row = bias.reshape(1, F_out).astype(jnp.float32)

    kernel = functools.partial(_conv1d_sub_kernel, kernel_size=K, stride=s,
                               halo=halo, f_in=F)

    out_padded = pl.pallas_call(
        kernel,
        out_shape=jax.ShapeDtypeStruct((B, n_tiles * tt, F_out), xs.dtype),
        grid_spec=pltpu.PrefetchScalarGridSpec(
            num_scalar_prefetch=0,
            grid=(B, n_tiles),
            in_specs=[
                pl.BlockSpec((1, tt, s * F), lambda b, j: (b, j, 0)),
                # halo: first halo_rows de-interleaved rows of the next tile.
                pl.BlockSpec((1, halo_rows, s * F),
                             lambda b, j: (b, (j + 1) * blocks_per_tile, 0)),
                # weight / bias: constant index -> DMA'd once, then revisited.
                # TODO(synk): single-buffer these (pl.Buffered(1)) to save VMEM.
                pl.BlockSpec((K * F, F_out), lambda b, j: (0, 0)),
                pl.BlockSpec((1, F_out), lambda b, j: (0, 0)),
            ],
            out_specs=pl.BlockSpec((1, tt, F_out), lambda b, j: (b, j, 0)),
        ),
        compiler_params=pltpu.CompilerParams(
            dimension_semantics=("parallel", "parallel"),
        ),
    )(x_r, x_r, w_cat, b_row)

    out = out_padded[:, :t_out]
    # glue: update_lens_1d — standard conv1d output-length formula.
    new_xlens = ((xlens.astype(jnp.int32) + 2 * pad - K) // s + 1).astype(xlens.dtype)
    return out, new_xlens


def _reference_forward(xs, xlens, weight, bias, *, factor, kernel_size,
                       compute_dtype=jnp.bfloat16):
    """Pure-JAX reference (lax conv) with the same bf16-input / f32-acc recipe."""
    pad = (kernel_size - 1) // 2
    x_ncl = jnp.transpose(xs.astype(compute_dtype), (0, 2, 1))
    y = lax.conv_general_dilated(
        x_ncl, weight.astype(compute_dtype),
        window_strides=(factor,), padding=[(pad, pad)],
        dimension_numbers=("NCH", "OIH", "NCH"),
        preferred_element_type=jnp.float32)
    y = y + bias[None, :, None]
    y = jnp.transpose(y, (0, 2, 1))
    y = jnp.maximum(y, 0.0).astype(xs.dtype)
    new_xlens = ((xlens.astype(jnp.int32) + 2 * pad - kernel_size) // factor + 1).astype(xlens.dtype)
    return y, new_xlens


if __name__ == "__main__":
    key = jax.random.PRNGKey(0)

    def run_case(B, T, F, factor, kernel_size, t_tile, lens):
        k_x, k_w, k_b = jax.random.split(jax.random.fold_in(key, T), 3)
        xs = jax.random.normal(k_x, (B, T, F), dtype=jnp.float32)
        xlens = jnp.array(lens, dtype=jnp.int32)

        # deterministic parameter init (PyTorch-style uniform bound)
        fan_in = F * kernel_size
        bound = 1.0 / math.sqrt(fan_in)
        weight = jax.random.uniform(k_w, (F, F, kernel_size), jnp.float32, -bound, bound)
        bias = jax.random.uniform(k_b, (F,), jnp.float32, -bound, bound)

        out, out_lens = conv1d_subsampler_forward(
            xs, xlens, weight, bias, factor=factor, kernel_size=kernel_size,
            t_tile=t_tile)
        out = jax.block_until_ready(out)
        out_lens = jax.block_until_ready(out_lens)

        ref, ref_lens = _reference_forward(
            xs, xlens, weight, bias, factor=factor, kernel_size=kernel_size)
        assert out.shape == ref.shape, (out.shape, ref.shape)
        max_err = float(jnp.max(jnp.abs(out - ref)))
        assert jnp.allclose(out, ref, atol=2e-2, rtol=2e-2), max_err
        assert jnp.array_equal(out_lens, ref_lens), (out_lens, ref_lens)

    # small, module-consistent shapes: B=2, T=16, n_units(F)=32, factor=2, K=3
    run_case(B=2, T=16, F=32, factor=2, kernel_size=3, t_tile=256, lens=[16, 11])
    # exercises multi-tile time grid with halo + partial last output tile
    run_case(B=2, T=37, F=32, factor=2, kernel_size=3, t_tile=8, lens=[37, 20])

    print("KERNEL_OK")
</pallas_src>

<mosaic_0001>
module attributes {stable_mosaic.version = 11 : i64} {
  func.func @_conv1d_sub_kernel(%arg0: i32, %arg1: i32, %arg2: memref<1x8x64xbf16, #tpu.memory_space<vmem>>, %arg3: memref<1x8x64xbf16, #tpu.memory_space<vmem>>, %arg4: memref<96x32xbf16, #tpu.memory_space<vmem>>, %arg5: memref<1x32xf32, #tpu.memory_space<vmem>>, %arg6: memref<1x8x32xf32, #tpu.memory_space<vmem>>) attributes {dimension_semantics = [#tpu.dimension_semantics<parallel>, #tpu.dimension_semantics<parallel>], iteration_bounds = array<i64: 2, 1>, scalar_prefetch = 0 : i64, scratch_operands = 0 : i64, tpu.core_type = #tpu.core_type<tc>, window_params = [{transform_indices = @transform_0, window_bounds = array<i64: 1, 8, 64>}, {transform_indices = @transform_1, window_bounds = array<i64: 1, 8, 64>}, {pipeline_mode = #tpu.pipeline_mode<synchronous>, transform_indices = @transform_2, window_bounds = array<i64: 96, 32>}, {pipeline_mode = #tpu.pipeline_mode<synchronous>, transform_indices = @transform_3, window_bounds = array<i64: 1, 32>}, {transform_indices = @transform_4, window_bounds = array<i64: 1, 8, 32>}]} {
    %c0 = arith.constant 0 : index
    %c0_0 = arith.constant 0 : index
    %c0_1 = arith.constant 0 : index
    %0 = vector.load %arg2[%c0, %c0_0, %c0_1] : memref<1x8x64xbf16, #tpu.memory_space<vmem>>, vector<1x8x64xbf16>
    %1 = vector.shape_cast %0 : vector<1x8x64xbf16> to vector<8x64xbf16>
    %2 = vector.extract_strided_slice %1 {offsets = [1, 0], sizes = [7, 64], strides = [1, 1]} : vector<8x64xbf16> to vector<7x64xbf16>
    %c0_2 = arith.constant 0 : index
    %c0_3 = arith.constant 0 : index
    %c0_4 = arith.constant 0 : index
    %3 = vector.load %arg3[%c0_2, %c0_3, %c0_4] : memref<1x8x64xbf16, #tpu.memory_space<vmem>>, vector<1x8x64xbf16>
    %4 = vector.shape_cast %3 : vector<1x8x64xbf16> to vector<8x64xbf16>
    %5 = vector.extract_strided_slice %4 {offsets = [0, 0], sizes = [1, 64], strides = [1, 1]} : vector<8x64xbf16> to vector<1x64xbf16>
    %6 = tpu.concatenate %2, %5 in 0 : vector<7x64xbf16>, vector<1x64xbf16> -> vector<8x64xbf16>
    %7 = vector.extract_strided_slice %6 {offsets = [0, 0], sizes = [8, 32], strides = [1, 1]} : vector<8x64xbf16> to vector<8x32xbf16>
    %8 = tpu.concatenate %1, %7 in 1 : vector<8x64xbf16>, vector<8x32xbf16> -> vector<8x96xbf16>
    %c0_5 = arith.constant 0 : index
    %c0_6 = arith.constant 0 : index
    %9 = vector.load %arg4[%c0_5, %c0_6] : memref<96x32xbf16, #tpu.memory_space<vmem>>, vector<96x32xbf16>
    %cst = arith.constant dense<0.000000e+00> : vector<8x32xf32>
    %10 = tpu.matmul %8, %9, %cst {dimension_numbers = #tpu.dot_dimension_numbers<[1], [0], [0], [1], [0, 0, 1, 1], [], []>} : vector<8x96xbf16>, vector<96x32xbf16>, vector<8x32xf32> -> vector<8x32xf32>
    %c0_7 = arith.constant 0 : index
    %c0_8 = arith.constant 0 : index
    %11 = vector.load %arg5[%c0_7, %c0_8] : memref<1x32xf32, #tpu.memory_space<vmem>>, vector<1x32xf32>
    %12 = vector.broadcast %11 : vector<1x32xf32> to vector<8x32xf32>
    %13 = arith.addf %10, %12 : vector<8x32xf32>
    %cst_9 = arith.constant 0.000000e+00 : f32
    %14 = vector.broadcast %cst_9 : f32 to vector<8x32xf32>
    %15 = arith.maximumf %13, %14 : vector<8x32xf32>
    %c0_10 = arith.constant 0 : index
    %c0_11 = arith.constant 0 : index
    %c0_12 = arith.constant 0 : index
    %16 = vector.load %arg6[%c0_10, %c0_11, %c0_12] : memref<1x8x32xf32, #tpu.memory_space<vmem>>, vector<1x8x32xf32>
    %17 = vector.shape_cast %16 : vector<1x8x32xf32> to vector<8x32xf32>
    %18 = vector.shape_cast %15 : vector<8x32xf32> to vector<1x8x32xf32>
    tpu.vector_store %arg6[%c0_10, %c0_11, %c0_12], %18 {strides = array<i32>} : memref<1x8x32xf32, #tpu.memory_space<vmem>>, vector<1x8x32xf32>,
    return
  }
  func.func @transform_0(%arg0: i32, %arg1: i32) -> (i32, i32, i32) {
    %c0_i32 = arith.constant 0 : i32
    %c0_i32_0 = arith.constant 0 : i32
    return %arg0, %arg1, %c0_i32 : i32, i32, i32
  }
  func.func @transform_1(%arg0: i32, %arg1: i32) -> (i32, i32, i32) {
    %c1_i32 = arith.constant 1 : i32
    %0 = arith.addi %arg1, %c1_i32 : i32
    %c1_i32_0 = arith.constant 1 : i32
    %1 = arith.muli %0, %c1_i32_0 : i32
    %c0_i32 = arith.constant 0 : i32
    %c0_i32_1 = arith.constant 0 : i32
    return %arg0, %1, %c0_i32 : i32, i32, i32
  }
  func.func @transform_2(%arg0: i32, %arg1: i32) -> (i32, i32) {
    %c0_i32 = arith.constant 0 : i32
    %c0_i32_0 = arith.constant 0 : i32
    %c0_i32_1 = arith.constant 0 : i32
    return %c0_i32, %c0_i32_0 : i32, i32
  }
  func.func @transform_3(%arg0: i32, %arg1: i32) -> (i32, i32) {
    %c0_i32 = arith.constant 0 : i32
    %c0_i32_0 = arith.constant 0 : i32
    %c0_i32_1 = arith.constant 0 : i32
    return %c0_i32, %c0_i32_0 : i32, i32
  }
  func.func @transform_4(%arg0: i32, %arg1: i32) -> (i32, i32, i32) {
    %c0_i32 = arith.constant 0 : i32
    %c0_i32_0 = arith.constant 0 : i32
    return %arg0, %arg1, %c0_i32 : i32, i32, i32
  }
}

</mosaic_0001>

<llo_original>
// kernel: tpu_custom_call.1
$region0: #{tpu_custom_call.1}
  #allocation0 [shape = 'u32[]', space=smem, size = 0x4, offset = 0x4, fixed_abs, tag = 'smem constant byte address 0x4 - core index']
  #allocation1 [shape = 'u32[144,128]{1,0:T(1,128)}', space=vmem, size = 0x12000, scoped, tag = 'internal scratch']
  %s0 = inlined_call_operand.vmem [shape: bf16[2,16,64], index: 0, kind: input, shape index: {}]
  %s1 = inlined_call_operand.vmem [shape: bf16[2,16,64], index: 1, kind: input, shape index: {}]
  %s2 = inlined_call_operand.vmem [shape: bf16[96,32], index: 2, kind: input, shape index: {}]
  %s3 = inlined_call_operand.vmem [shape: f32[1,32], index: 3, kind: input, shape index: {}]
  %s4 = inlined_call_operand.hbm [shape: f32[2,8,32], index: 4, kind: output, shape index: {}]
  %s5 = sld [smem:[#allocation0]]
  $region49: #{tpu_custom_call.1} parent=0
    _
  %s7 = ssub.s32 1, %s5
  %s8 = scalar_select 0, %s7, %s5
  $region1: #{tpu_custom_call.1} parent=0
    #allocation2 [shape = 'u8[8192]{0}', space=vmem, size = 0x2000, scoped, tag = 'output window, operand 0']
    #allocation3 [shape = 's32[2]{0}', space=sflag, size = 0x8, scoped, tag = 'scoped memory for tpu_custom_call.1']
    %9 = vsyncpa [#allocation3], 0
    %s10 = scalar_lea.sflag [#allocation3], 1
    %11 = vsyncpa %s10, 0
    loop: start=0, step=1, limit=4
    $region2: #{tpu_custom_call.1} parent=1 // loop_pre_header
      _
    $region3: #{tpu_custom_call.1} parent=1 // loop_header
      %s13 = sphi 0, %s17
      %p14 = scmp.ge.s32.totalorder %s13, 4
      %s20 = sphi 0, %s32
      %s21 = sphi 0, %s28
      %s22 = sphi 0, %s20
      %s23 = sphi 0, %s21
      %s24 = sphi 0, %s22
      %s25 = sphi 0, %s23
      %s37 = sphi 0, %s39
      %s40 = sphi 0, %s37
      %s41 = sphi 0, %s40
      %s57 = sphi 0, %s41
      %s67 = sphi 0, %s69
      %s70 = sphi 0, %s67
      %s71 = sphi 0, %s70
      %s87 = sphi 0, %s71
      %s91 = sphi 0, %s91
      %s93 = sphi 0, %s91
      %s94 = sphi 0, %s93
      %s108 = sphi 0, %s94
      %s112 = sphi 0, %s112
      %s114 = sphi 0, %s112
      %s115 = sphi 0, %s114
      %s129 = sphi 0, %s115
      %s137 = sphi 0, %s139
      %s140 = sphi 0, %s137
      %s141 = sphi 0, %s140
      %s157 = sphi 0, %s141
    $region4: #{tpu_custom_call.1} parent=1 // loop_header_branch
      %16 = sbr.rel (%p14) target = $region8
    $region5: #{tpu_custom_call.1} parent=1 // loop_body
      %s18 = ssub.s32 %s13, 1
      %s19 = ssub.s32 %s13, 2
      %s26 = sadd.s32 1, %s21
      %p27 = scmp.ge.s32.totalorder %s26, 1
      %s28 = scalar_select %p27, 0, %s26
      %s29 = sadd.s32 1, %s20
      %s30 = scalar_select %p27, %s29, %s20
      %p31 = scmp.ge.s32.totalorder %s30, 2
      %s32 = scalar_select %p31, 0, %s30
      %s33 = ssub.s32 %s20, %s32
      %s34 = ssub.s32 %s21, %s28
      %s35 = sor.u32 %s33, %s34
      %p36 = scmp.eq.s32.totalorder %s35, 0
      %s38 = sadd.s32 %s37, 1
      %s39 = scalar_select %p36, %s37, %s38
      %p42 = pneg %p36
      %p43 = scmp.eq.s32.totalorder %s13, 1
      %p44 = por %p42, %p43
      %p45 = scmp.ne.s32.totalorder %s37, %s40
      %p46 = scmp.eq.s32.totalorder %s13, 0
      %p47 = por %p45, %p46
      %p48 = scmp.ne.s32.totalorder %s37, %s40
      %p49 = scmp.eq.s32.totalorder %s18, 1
      %p50 = por %p48, %p49
      %p51 = scmp.ne.s32.totalorder %s40, %s41
      %p52 = scmp.eq.s32.totalorder %s18, 0
      %p53 = por %p51, %p52
      %p54 = scmp.ne.s32.totalorder %s40, %s41
      %p55 = scmp.eq.s32.totalorder %s19, 1
      %p56 = por %p54, %p55
      %p58 = scmp.ne.s32.totalorder %s41, %s57
      %p59 = scmp.eq.s32.totalorder %s19, 0
      %p60 = por %p58, %p59
      %s61 = sadd.s32 %s21, 1
      %s62 = sadd.s32 %s28, 1
      %s63 = ssub.s32 %s20, %s32
      %s64 = ssub.s32 %s61, %s62
      %s65 = sor.u32 %s63, %s64
      %p66 = scmp.eq.s32.totalorder %s65, 0
      %s68 = sadd.s32 %s67, 1
      %s69 = scalar_select %p66, %s67, %s68
      %p72 = pneg %p66
      %p73 = scmp.eq.s32.totalorder %s13, 1
      %p74 = por %p72, %p73
      %p75 = scmp.ne.s32.totalorder %s67, %s70
      %p76 = scmp.eq.s32.totalorder %s13, 0
      %p77 = por %p75, %p76
      %p78 = scmp.ne.s32.totalorder %s67, %s70
      %p79 = scmp.eq.s32.totalorder %s18, 1
      %p80 = por %p78, %p79
      %p81 = scmp.ne.s32.totalorder %s70, %s71
      %p82 = scmp.eq.s32.totalorder %s18, 0
      %p83 = por %p81, %p82
      %p84 = scmp.ne.s32.totalorder %s70, %s71
      %p85 = scmp.eq.s32.totalorder %s19, 1
      %p86 = por %p84, %p85
      %p88 = scmp.ne.s32.totalorder %s71, %s87
      %p89 = scmp.eq.s32.totalorder %s19, 0
      %p90 = por %p88, %p89
      %s92 = sadd.s32 %s91, 1
      %p95 = scmp.eq.s32.totalorder %s13, 1
      %p96 = scmp.ne.s32.totalorder %s91, %s93
      %p97 = scmp.eq.s32.totalorder %s13, 0
      %p98 = por %p96, %p97
      %p99 = scmp.ne.s32.totalorder %s91, %s93
      %p100 = scmp.eq.s32.totalorder %s18, 1
      %p101 = por %p99, %p100
      %p102 = scmp.ne.s32.totalorder %s93, %s94
      %p103 = scmp.eq.s32.totalorder %s18, 0
      %p104 = por %p102, %p103
      %p105 = scmp.ne.s32.totalorder %s93, %s94
      %p106 = scmp.eq.s32.totalorder %s19, 1
      %p107 = por %p105, %p106
      %p109 = scmp.ne.s32.totalorder %s94, %s108
      %p110 = scmp.eq.s32.totalorder %s19, 0
      %p111 = por %p109, %p110
      %s113 = sadd.s32 %s112, 1
      %p116 = scmp.eq.s32.totalorder %s13, 1
      %p117 = scmp.ne.s32.totalorder %s112, %s114
      %p118 = scmp.eq.s32.totalorder %s13, 0
      %p119 = por %p117, %p118
      %p120 = scmp.ne.s32.totalorder %s112, %s114
      %p121 = scmp.eq.s32.totalorder %s18, 1
      %p122 = por %p120, %p121
      %p123 = scmp.ne.s32.totalorder %s114, %s115
      %p124 = scmp.eq.s32.totalorder %s18, 0
      %p125 = por %p123, %p124
      %p126 = scmp.ne.s32.totalorder %s114, %s115
      %p127 = scmp.eq.s32.totalorder %s19, 1
      %p128 = por %p126, %p127
      %p130 = scmp.ne.s32.totalorder %s115, %s129
      %p131 = scmp.eq.s32.totalorder %s19, 0
      %p132 = por %p130, %p131
      %s133 = ssub.s32 %s20, %s32
      %s134 = ssub.s32 %s21, %s28
      %s135 = sor.u32 %s133, %s134
      %p136 = scmp.eq.s32.totalorder %s135, 0
      %s138 = sadd.s32 %s137, 1
      %s139 = scalar_select %p136, %s137, %s138
      %p142 = pneg %p136
      %p143 = scmp.eq.s32.totalorder %s13, 1
      %p144 = por %p142, %p143
      %p145 = scmp.ne.s32.totalorder %s137, %s140
      %p146 = scmp.eq.s32.totalorder %s13, 0
      %p147 = por %p145, %p146
      %p148 = scmp.ne.s32.totalorder %s137, %s140
      %p149 = scmp.eq.s32.totalorder %s18, 1
      %p150 = por %p148, %p149
      %p151 = scmp.ne.s32.totalorder %s140, %s141
      %p152 = scmp.eq.s32.totalorder %s18, 0
      %p153 = por %p151, %p152
      %p154 = scmp.ne.s32.totalorder %s140, %s141
      %p155 = scmp.eq.s32.totalorder %s19, 1
      %p156 = por %p154, %p155
      %p158 = scmp.ne.s32.totalorder %s141, %s157
      %p159 = scmp.eq.s32.totalorder %s19, 0
      %p160 = por %p158, %p159
      %p161 = scmp.le.s32.totalorder 1, %s13
      %p162 = scmp.lt.s32.totalorder %s13, 3
      %p163 = pnand %p161, %p162
      %p164 = pneg %p163
      // Predicated region
      $region9: #{tpu_custom_call.1} parent=5 // pred_check
        _
      $region10: #{tpu_custom_call.1} parent=5 // pred_check_branch
        %166 = sbr.rel (%p163) target = $region12
      $region11: #{tpu_custom_call.1} parent=5 // pred_region
        %s167 = ssub.s32 %s13, 1
        // Predicated region
        $region13: #{tpu_custom_call.1} parent=11 // pred_check
          %p168 = pneg %p104
        $region14: #{tpu_custom_call.1} parent=11 // pred_check_branch
          %170 = sbr.rel (%p168) target = $region16
        $region15: #{tpu_custom_call.1} parent=11 // pred_region
          _
        $region16: #{tpu_custom_call.1} parent=11 // pred_fallthru
          _
        // Predicated region
        $region17: #{tpu_custom_call.1} parent=11 // pred_check
          %p171 = pneg %p125
        $region18: #{tpu_custom_call.1} parent=11 // pred_check_branch
          %173 = sbr.rel (%p171) target = $region20
        $region19: #{tpu_custom_call.1} parent=11 // pred_region
          _
        $region20: #{tpu_custom_call.1} parent=11 // pred_fallthru
          _
      $region12: #{tpu_custom_call.1} parent=5 // pred_fallthru
        _
      %p174 = scmp.lt.s32.totalorder %s13, 2
      // Predicated region
      $region21: #{tpu_custom_call.1} parent=5 // pred_check
        %p175 = pneg %p174
      $region22: #{tpu_custom_call.1} parent=5 // pred_check_branch
        %177 = sbr.rel (%p175) target = $region24
      $region23: #{tpu_custom_call.1} parent=5 // pred_region
        // Predicated region
        $region25: #{tpu_custom_call.1} parent=23 // pred_check
          %p178 = pneg %p47
        $region26: #{tpu_custom_call.1} parent=23 // pred_check_branch
          %180 = sbr.rel (%p178) target = $region28
        $region27: #{tpu_custom_call.1} parent=23 // pred_region
          %p181 = scmp.lt.s32.totalorder %s20, 1
          %s182 = scalar_select %p181, %s20, 1
          %p183 = scmp.lt.s32.totalorder %s21, 1
          %s184 = scalar_select %p183, %s21, 1
          %s185 = smul.addr %s182, 2
          %s186 = sadd.s32 %s184, %s185
          %s187 = smul.addr %s186, 4
          %s188 = scalar_lea.vmem %s0, %s187
        $region28: #{tpu_custom_call.1} parent=23 // pred_fallthru
          _
        // Predicated region
        $region29: #{tpu_custom_call.1} parent=23 // pred_check
          %p189 = pneg %p77
        $region30: #{tpu_custom_call.1} parent=23 // pred_check_branch
          %191 = sbr.rel (%p189) target = $region32
        $region31: #{tpu_custom_call.1} parent=23 // pred_region
          %s192 = sadd.s32 %s21, 1
          %p193 = scmp.lt.s32.totalorder %s20, 1
          %s194 = scalar_select %p193, %s20, 1
          %p195 = scmp.lt.s32.totalorder %s192, 1
          %s196 = scalar_select %p195, %s192, 1
          %s197 = smul.addr %s194, 2
          %s198 = sadd.s32 %s196, %s197
          %s199 = smul.addr %s198, 4
          %s200 = scalar_lea.vmem %s1, %s199
          %s201 = sadd.s32 %s21, 1
        $region32: #{tpu_custom_call.1} parent=23 // pred_fallthru
          _
      $region24: #{tpu_custom_call.1} parent=5 // pred_fallthru
        _
      %p202 = scmp.le.s32.totalorder 1, %s13
      %p203 = scmp.lt.s32.totalorder %s13, 3
      %p204 = pnand %p202, %p203
      %p205 = pneg %p204
      // Predicated region
      $region33: #{tpu_custom_call.1} parent=5 // pred_check
        _
      $region34: #{tpu_custom_call.1} parent=5 // pred_check_branch
        %207 = sbr.rel (%p204) target = $region36
      $region35: #{tpu_custom_call.1} parent=5 // pred_region
        %s208 = ssub.s32 %s13, 1
        %p209 = scmp.lt.s32.totalorder %s22, 1
        %s210 = scalar_select %p209, %s22, 1
        %p211 = scmp.lt.s32.totalorder %s23, 1
        %s212 = scalar_select %p211, %s23, 1
        %s213 = smul.addr %s210, 2
        %s214 = sadd.s32 %s212, %s213
        %s215 = smul.addr %s214, 4
        %s216 = scalar_lea.vmem %s0, %s215
        %p217 = pneg %p53
        %p218 = pneg %p50
        %s219 = sadd.s32 %s23, 1
        %p220 = scmp.lt.s32.totalorder %s22, 1
        %s221 = scalar_select %p220, %s22, 1
        %p222 = scmp.lt.s32.totalorder %s219, 1
        %s223 = scalar_select %p222, %s219, 1
        %s224 = smul.addr %s221, 2
        %s225 = sadd.s32 %s223, %s224
        %s226 = smul.addr %s225, 4
        %s227 = scalar_lea.vmem %s1, %s226
        %p228 = pneg %p83
        %p229 = pneg %p80
        %p230 = pneg %p104
        %p231 = pneg %p101
        %p232 = pneg %p125
        %p233 = pneg %p122
        %p234 = pneg %p153
        %p235 = pneg %p150
        %s236 = sand.u32 %s140, 1
        %s237 = scalar_lea.sflag [#allocation3], %s236
        %s238 = sand.u32 %s140, 1
        %s239 = smul.addr %s238, 8
        %s240 = scalar_lea.vmem [#allocation2], %s239
        %p241 = scmp.lt.s32.totalorder %s22, 1
        %s242 = scalar_select %p241, %s22, 1
        %p243 = scmp.lt.s32.totalorder %s23, 1
        %s244 = scalar_select %p243, %s23, 1
        %s245 = smul.addr %s242, 2
        %s246 = sadd.s32 %s244, %s245
        %s247 = smul.addr %s246, 4
        %s248 = scalar_lea.vmem %s0, %s247
        %s249 = sadd.s32 %s23, 1
        %p250 = scmp.lt.s32.totalorder %s22, 1
        %s251 = scalar_select %p250, %s22, 1
        %p252 = scmp.lt.s32.totalorder %s249, 1
        %s253 = scalar_select %p252, %s249, 1
        %s254 = smul.addr %s251, 2
        %s255 = sadd.s32 %s253, %s254
        %s256 = smul.addr %s255, 4
        %s257 = scalar_lea.vmem %s1, %s256
        %s258 = sadd.s32 %s23, 1
        %v260 = vld [vmem:[%s248] sm:$0xf]
        %v261 = vld [vmem:[%s257] sm:$0xf]
        %v263 = vunpack.c.l.b16 %v260
        %v264 = vpack.c.b16 %v263, %v263
        %v266 = vshrl.u32 %v264, 16
        %v268 = vshll.u32 %v264, 16
        %v270 = vrot.slane %v268, 1
        %v271 = vor.u32 %v266, %v270
        %v274 = vunpack.c.l.b16 %v261
        %v275 = vpack.c.b16 %v274, %v274
        %v277 = vshll.u32 %v275, 16
        %v279 = vrot.slane %v277, 5
        %vm281 = vcmask 1043456
        %vm282 = vsmask.f32 3328
        %vm283 = vmand %vm281, %vm282
        %v284 = vsel %vm283, %v271, %v279
        %286 = vrot.lane.b32.xlu0 %v284, 64
        %v287 = vpop.permute.xlu0 %286
        %vm288 = vcmask 523264
        %v291 = vsel %vm288, %v260, %v287
        %v292 = vld [vmem:[%s2] sm:$0xf]
        %v293 = vld [vmem:[%s2 + $0x4] sm:$0xf]
        %v294 = vld [vmem:[%s2 + $0x8] sm:$0xf]
        %v295 = vld [vmem:[%s2 + $0xc] sm:$0xf]
        %v296 = vld [vmem:[%s2 + $0x10] sm:$0xf]
        %v297 = vld [vmem:[%s2 + $0x14] sm:$0xf]
        %v298 = vld [vmem:[%s2 + $0x18] sm:$0xf]
        %v299 = vld [vmem:[%s2 + $0x1c] sm:$0xf]
        %v300 = vld [vmem:[%s2 + $0x20] sm:$0xf]
        %v301 = vld [vmem:[%s2 + $0x24] sm:$0xf]
        %v302 = vld [vmem:[%s2 + $0x28] sm:$0xf]
        %v303 = vld [vmem:[%s2 + $0x2c] sm:$0xf]
        %v304 = vld [vmem:[%s3] sm:$0x1]
        %v306 = vlaneseq
        %v307 = vshrl.u32 %v306, 7
        %v308 = vsub.s32 0, %v307
        %v309 = vrot.slane %v304, %v308
        %v323 = vunpack.c.l.b16 %v292
        %v324 = vunpack.c.l.b16 %v293
        %v325 = vunpack.c.l.b16 %v294
        %v326 = vunpack.c.l.b16 %v295
        %v327 = vunpack.c.l.b16 %v296
        %v328 = vunpack.c.l.b16 %v297
        %v329 = vunpack.c.l.b16 %v298
        %v330 = vunpack.c.l.b16 %v299
        %v331 = vunpack.c.l.b16 %v300
        %v332 = vunpack.c.l.b16 %v301
        %v333 = vunpack.c.l.b16 %v302
        %v334 = vunpack.c.l.b16 %v303
        %v335 = vpack.c.b16 %v324, %v323
        %v336 = vpack.c.b16 %v326, %v325
        %v337 = vpack.c.b16 %v328, %v327
        %v338 = vpack.c.b16 %v330, %v329
        %v339 = vpack.c.b16 %v332, %v331
        %v340 = vpack.c.b16 %v334, %v333
        %vm347 = vcmask 785408
        %v348 = vsel %vm347, %v291, 0
        %350 = vmatprep.subr.bf16.mxu0 0
        %351 = vmatpush1.bf16.msra.mxu0 0
        %352 = vmatprep.subr.bf16.mxu0 0
        %353 = vmatpush1.bf16.msra.mxu0 0
        %354 = vmatprep.subr.bf16.mxu0 0
        %355 = vmatpush1.bf16.msra.mxu0 %v340
        %356 = vmatprep.subr.bf16.mxu0 0
        %357 = vmatpush1.bf16.msra.mxu0 %v339
        %358 = vmatprep.subr.bf16.mxu0 0
        %359 = vmatpush1.bf16.msra.mxu0 %v338
        %360 = vmatprep.subr.bf16.mxu0 0
        %361 = vmatpush1.bf16.msra.mxu0 %v337
        %362 = vmatprep.subr.bf16.mxu0 0
        %363 = vmatpush1.bf16.msra.mxu0 %v336
        %364 = vmatprep.subr.bf16.mxu0 0
        %365 = vmatpush1.bf16.msra.mxu0 %v335
        %366 = vmatprep.subr.bf16.mxu0 0
        %367 = vmatpush2.bf16.msra.mxu0 0
        %368 = vmatprep.subr.bf16.mxu0 0
        %369 = vmatpush2.bf16.msra.mxu0 0
        %370 = vmatprep.subr.bf16.mxu0 0
        %371 = vmatpush2.bf16.msra.mxu0 0
        %372 = vmatprep.subr.bf16.mxu0 0
        %373 = vmatpush2.bf16.msra.mxu0 0
        %374 = vmatprep.subr.bf16.mxu0 0
        %375 = vmatpush2.bf16.msra.mxu0 0
        %376 = vmatprep.subr.bf16.mxu0 0
        %377 = vmatpush2.bf16.msra.mxu0 0
        %378 = vmatprep.subr.bf16.mxu0 0
        %379 = vmatpush2.bf16.msra.mxu0 0
        %380 = vmatprep.subr.bf16.mxu0 0
        %381 = vmatpush2.bf16.msra.mxu0 0
        %382 = vmatprep.mubr.bf16.mxu0 0
        %383 = vmatmul.mubr.bf16.gmra.mxu0 %v348
        %v384 = vpop.f32.mrf.mxu0
        %v385 = vadd.f32 %v309, %v384
        %v386 = vpop.f32.mrf.mxu0
        %v387 = vpop.f32.mrf.mxu0
        %v388 = vpop.f32.mrf.mxu0
        %389 = vdwg.mxu0
        %v390 = vmax.f32 %v385, 0.0
        %vm391 = vcmask 261120
        %392 = vst.msk [vmem:[%s240] sm:$0xff] %vm391, %v390
        %s393 = sand.u32 %s140, 1
        %s394 = scalar_lea.sflag [#allocation3], %s393
        %s395 = sand.u32 %s140, 1
        %s396 = smul.addr %s395, 8
        %s397 = scalar_lea.vmem [#allocation2], %s396
        // Predicated region
        $region37: #{tpu_custom_call.1} parent=35 // pred_check
          %p398 = pneg %p150
        $region38: #{tpu_custom_call.1} parent=35 // pred_check_branch
          %400 = sbr.rel (%p398) target = $region40
        $region39: #{tpu_custom_call.1} parent=35 // pred_region
          %s402 = ssub.s32 128, 128
          %403 = vsyncadd %s394, %s402
          %s404 = sadd.s32 %s23, %s22
          %s405 = smul.addr %s404, 128
          %s406 = scalar_lea.hbm %s4, %s405
          %s408 = sshll.u32 %s397, 4
          %s409 = int_to_ptr.vmem [resolvable:$true] %s408
          %411 = dma.vmem_to_hbm [thread:$0]  %s409, 128, %s406, %s394
        $region40: #{tpu_custom_call.1} parent=35 // pred_fallthru
          _
      $region36: #{tpu_custom_call.1} parent=5 // pred_fallthru
        _
      %p412 = scmp.le.s32.totalorder 2, %s13
      // Predicated region
      $region41: #{tpu_custom_call.1} parent=5 // pred_check
        %p413 = pneg %p412
      $region42: #{tpu_custom_call.1} parent=5 // pred_check_branch
        %415 = sbr.rel (%p413) target = $region44
      $region43: #{tpu_custom_call.1} parent=5 // pred_region
        %s416 = ssub.s32 %s13, 2
        // Predicated region
        $region45: #{tpu_custom_call.1} parent=43 // pred_check
          %p417 = pneg %p156
        $region46: #{tpu_custom_call.1} parent=43 // pred_check_branch
          %419 = sbr.rel (%p417) target = $region48
        $region47: #{tpu_custom_call.1} parent=43 // pred_region
          %s420 = sand.u32 %s141, 1
          %s421 = scalar_lea.sflag [#allocation3], %s420
          %s422 = sand.u32 %s141, 1
          %s423 = smul.addr %s422, 8
          %s424 = scalar_lea.vmem [#allocation2], %s423
          %425 = dma.done %s421, 128
        $region48: #{tpu_custom_call.1} parent=43 // pred_fallthru
          _
      $region44: #{tpu_custom_call.1} parent=5 // pred_fallthru
        _
    $region6: #{tpu_custom_call.1} parent=1 // loop_footer
      %s17 = sadd.s32 1, %s13
    $region7: #{tpu_custom_call.1} parent=1 // loop_footer_branch
      %12 = sbr.rel target = $region3
    $region8: #{tpu_custom_call.1} parent=1 // loop_exit
      _
    %426 = vsyncpa [#allocation3], 1
    %s427 = scalar_lea.sflag [#allocation3], 1
    %428 = vsyncpa %s427, 1

</llo_original>
